<compile_context>
chip_gen: v7x
topology: tpu7x:2x2x1
jax: 0.10.0
libtpu: 0.0.40
codegen_flags: <defaults>
</compile_context>

<pallas_src>
import functools

import jax
import jax.numpy as jnp
from jax import lax
from jax.experimental import pallas as pl
from jax.experimental.pallas import tpu as pltpu

EPS = 1e-5


def _stats_kernel(x_ref, w1_ref, g1_ref, b1_ref, w2_ref, s1_ref, s2_ref,
                  *, batch, tile_b):
    """Two-phase full-batch BN statistics.

    s1_ref (2, D): row 0 = sum(h)   -> mean1;  row 1 = sum(h*h) -> rsqrt(var1+eps)
    s2_ref (2, P): row 0 = sum(y)   -> mean2;  row 1 = sum(y*y) -> rsqrt(var2+eps)
    """
    phase = pl.program_id(0)
    b = pl.program_id(1)
    nb = pl.num_programs(1)

    @pl.when(jnp.logical_and(phase == 0, b == 0))
    def _init():
        s1_ref[...] = jnp.zeros_like(s1_ref)
        s2_ref[...] = jnp.zeros_like(s2_ref)

    x = x_ref[...].astype(jnp.float32)

    # Mask ragged tail rows of the last tile (statically elided when B % tile_b == 0).
    needs_mask = (batch % tile_b) != 0
    if needs_mask:
        row = lax.broadcasted_iota(jnp.int32, (tile_b, 1), 0) + b * tile_b
        valid = row < batch
        x = jnp.where(valid, x, 0.0)

    h = jnp.dot(x, w1_ref[...], preferred_element_type=jnp.float32)

    @pl.when(phase == 0)
    def _bn1_stats():
        s1_ref[0:1, :] += jnp.sum(h, axis=0, keepdims=True)
        s1_ref[1:2, :] += jnp.sum(h * h, axis=0, keepdims=True)

        @pl.when(b == nb - 1)
        def _finalize1():
            mean = s1_ref[0:1, :] * (1.0 / batch)
            var = s1_ref[1:2, :] * (1.0 / batch) - mean * mean  # biased variance
            s1_ref[0:1, :] = mean
            s1_ref[1:2, :] = lax.rsqrt(var + EPS)

    @pl.when(phase == 1)
    def _bn2_stats():
        # bn1 (affine) + ReLU using the stats finalized at the end of phase 0
        # (s1_ref stays resident in VMEM across the whole grid).
        hn = (h - s1_ref[0:1, :]) * s1_ref[1:2, :] * g1_ref[...] + b1_ref[...]
        hn = jnp.maximum(hn, 0.0)
        if needs_mask:
            hn = jnp.where(valid, hn, 0.0)
        y = jnp.dot(hn, w2_ref[...], preferred_element_type=jnp.float32)
        s2_ref[0:1, :] += jnp.sum(y, axis=0, keepdims=True)
        s2_ref[1:2, :] += jnp.sum(y * y, axis=0, keepdims=True)

        @pl.when(b == nb - 1)
        def _finalize2():
            mean = s2_ref[0:1, :] * (1.0 / batch)
            var = s2_ref[1:2, :] * (1.0 / batch) - mean * mean
            s2_ref[0:1, :] = mean
            s2_ref[1:2, :] = lax.rsqrt(var + EPS)


def _normalize_kernel(x_ref, w1_ref, g1_ref, b1_ref, w2_ref, s1_ref, s2_ref,
                      o_ref):
    """Per-B-tile forward pass using precomputed full-batch BN stats."""
    x = x_ref[...].astype(jnp.float32)
    h = jnp.dot(x, w1_ref[...], preferred_element_type=jnp.float32)
    h = (h - s1_ref[0:1, :]) * s1_ref[1:2, :] * g1_ref[...] + b1_ref[...]
    h = jnp.maximum(h, 0.0)
    y = jnp.dot(h, w2_ref[...], preferred_element_type=jnp.float32)
    o_ref[...] = ((y - s2_ref[0:1, :]) * s2_ref[1:2, :]).astype(o_ref.dtype)


def prepare_critic_params(w1, gamma1, beta1, w2):
    """One-time (init-time) parameter massaging — keep OUT of the hot call path.

    w1: (D, D) PyTorch Linear layout (out, in); w2: (P, D); gamma1/beta1: (D,).
    """
    D = w1.shape[1]
    return {
        "w1": jnp.asarray(w1, jnp.float32).T,               # (D, D)  (in, out)
        "g1": jnp.asarray(gamma1, jnp.float32).reshape(1, D),
        "b1": jnp.asarray(beta1, jnp.float32).reshape(1, D),
        "w2": jnp.asarray(w2, jnp.float32).T,               # (D, P)  (in, out)
    }


def critic_forward(x, params, *, block_b=2048):
    """x: (B, D) f32 or bf16; params: output of prepare_critic_params()."""
    B, D = x.shape
    P = params["w2"].shape[1]
    tb = B if B <= block_b else block_b        # rows per tile
    nb = pl.cdiv(B, tb)

    w1, g1, b1, w2 = params["w1"], params["g1"], params["b1"], params["w2"]

    # ---- call 1: full-batch BN statistics (two sequential phases over B tiles)
    stats_kernel = functools.partial(_stats_kernel, batch=B, tile_b=tb)
    s1, s2 = pl.pallas_call(
        stats_kernel,
        out_shape=(jax.ShapeDtypeStruct((2, D), jnp.float32),
                   jax.ShapeDtypeStruct((2, P), jnp.float32)),
        grid=(2, nb),
        in_specs=[
            pl.BlockSpec((tb, D), lambda p, b: (b, 0)),   # x tile
            pl.BlockSpec((D, D), lambda p, b: (0, 0)),    # w1 (resident)
            pl.BlockSpec((1, D), lambda p, b: (0, 0)),    # gamma1
            pl.BlockSpec((1, D), lambda p, b: (0, 0)),    # beta1
            pl.BlockSpec((D, P), lambda p, b: (0, 0)),    # w2 (resident)
        ],
        out_specs=(
            pl.BlockSpec((2, D), lambda p, b: (0, 0)),    # bn1 stats (resident acc)
            pl.BlockSpec((2, P), lambda p, b: (0, 0)),    # bn2 stats (resident acc)
        ),
        compiler_params=pltpu.CompilerParams(
            dimension_semantics=("arbitrary", "arbitrary")),
    )(x, w1, g1, b1, w2)

    # ---- call 2: normalize + write output; B axis is row-parallel (megacore)
    out = pl.pallas_call(
        _normalize_kernel,
        out_shape=jax.ShapeDtypeStruct((B, P), x.dtype),
        grid=(nb,),
        in_specs=[
            pl.BlockSpec((tb, D), lambda b: (b, 0)),
            pl.BlockSpec((D, D), lambda b: (0, 0)),
            pl.BlockSpec((1, D), lambda b: (0, 0)),
            pl.BlockSpec((1, D), lambda b: (0, 0)),
            pl.BlockSpec((D, P), lambda b: (0, 0)),
            pl.BlockSpec((2, D), lambda b: (0, 0)),
            pl.BlockSpec((2, P), lambda b: (0, 0)),
        ],
        out_specs=pl.BlockSpec((tb, P), lambda b: (b, 0)),
        compiler_params=pltpu.CompilerParams(
            dimension_semantics=("parallel",)),
    )(x, w1, g1, b1, w2, s1, s2)
    return out


def reference_forward(x, w1, gamma1, beta1, w2):
    """Pure-JAX reference mirroring the PyTorch module (training-mode BN)."""
    x = x.astype(jnp.float32)
    h = x @ w1.T
    m = h.mean(0, keepdims=True)
    v = ((h - m) ** 2).mean(0, keepdims=True)
    h = (h - m) / jnp.sqrt(v + EPS) * gamma1 + beta1
    h = jnp.maximum(h, 0.0)
    y = h @ w2.T
    m2 = y.mean(0, keepdims=True)
    v2 = ((y - m2) ** 2).mean(0, keepdims=True)
    return (y - m2) / jnp.sqrt(v2 + EPS)


if __name__ == "__main__":
    latent_dim = 32
    projection_dim = 128

    key = jax.random.PRNGKey(0)
    k_x, k_x2, k_w1, k_w2 = jax.random.split(key, 4)

    # Synthetic deterministic params (PyTorch Linear weight layout = (out, in)).
    w1 = jax.random.normal(k_w1, (latent_dim, latent_dim), jnp.float32) * 0.1
    w2 = jax.random.normal(k_w2, (projection_dim, latent_dim), jnp.float32) * 0.1
    gamma1 = jnp.ones((latent_dim,), jnp.float32)   # bn1 default affine init
    beta1 = jnp.zeros((latent_dim,), jnp.float32)

    params = prepare_critic_params(w1, gamma1, beta1, w2)   # init-time, not per-call
    fwd = jax.jit(critic_forward, static_argnames=("block_b",))

    # --- check 1: single-tile path (B=8) ---
    x = jax.random.normal(k_x, (8, latent_dim), jnp.float32)
    out = jax.block_until_ready(fwd(x, params))
    ref = reference_forward(x, w1, gamma1, beta1, w2)
    assert out.shape == (8, projection_dim)
    assert jnp.allclose(out, ref, atol=1e-4, rtol=1e-4), "mismatch vs reference (B=8)"

    # --- check 2: multi-tile path (B=24, 3 tiles of 8) — full-batch BN stats across tiles ---
    x2 = jax.random.normal(k_x2, (24, latent_dim), jnp.float32)
    out2 = jax.block_until_ready(fwd(x2, params, block_b=8))
    ref2 = reference_forward(x2, w1, gamma1, beta1, w2)
    assert out2.shape == (24, projection_dim)
    assert jnp.allclose(out2, ref2, atol=1e-4, rtol=1e-4), "mismatch vs reference (tiled)"

    print("KERNEL_OK")
</pallas_src>

<mosaic_0001>
module attributes {stable_mosaic.version = 11 : i64} {
  func.func @_stats_kernel(%arg0: i32, %arg1: i32, %arg2: memref<8x32xf32, #tpu.memory_space<vmem>>, %arg3: memref<32x32xf32, #tpu.memory_space<vmem>>, %arg4: memref<1x32xf32, #tpu.memory_space<vmem>>, %arg5: memref<1x32xf32, #tpu.memory_space<vmem>>, %arg6: memref<32x128xf32, #tpu.memory_space<vmem>>, %arg7: memref<2x32xf32, #tpu.memory_space<vmem>>, %arg8: memref<2x128xf32, #tpu.memory_space<vmem>>) attributes {dimension_semantics = [#tpu.dimension_semantics<arbitrary>, #tpu.dimension_semantics<arbitrary>], iteration_bounds = array<i64: 2, 1>, scalar_prefetch = 0 : i64, scratch_operands = 0 : i64, tpu.core_type = #tpu.core_type<tc>, window_params = [{transform_indices = @transform_0, window_bounds = array<i64: 8, 32>}, {pipeline_mode = #tpu.pipeline_mode<synchronous>, transform_indices = @transform_1, window_bounds = array<i64: 32, 32>}, {pipeline_mode = #tpu.pipeline_mode<synchronous>, transform_indices = @transform_2, window_bounds = array<i64: 1, 32>}, {pipeline_mode = #tpu.pipeline_mode<synchronous>, transform_indices = @transform_3, window_bounds = array<i64: 1, 32>}, {pipeline_mode = #tpu.pipeline_mode<synchronous>, transform_indices = @transform_4, window_bounds = array<i64: 32, 128>}, {pipeline_mode = #tpu.pipeline_mode<synchronous>, transform_indices = @transform_5, window_bounds = array<i64: 2, 32>}, {pipeline_mode = #tpu.pipeline_mode<synchronous>, transform_indices = @transform_6, window_bounds = array<i64: 2, 128>}]} {
    %c0_i32 = arith.constant 0 : i32
    %0 = arith.cmpi eq, %arg0, %c0_i32 : i32
    %c0_i32_0 = arith.constant 0 : i32
    %1 = arith.cmpi eq, %arg1, %c0_i32_0 : i32
    %2 = arith.andi %0, %1 : i1
    %3 = arith.extui %2 : i1 to i32
    %c0_i32_1 = arith.constant 0 : i32
    %4 = arith.cmpi ne, %3, %c0_i32_1 : i32
    scf.if %4 {
      %cst_8 = arith.constant 0.000000e+00 : f32
      %14 = vector.broadcast %cst_8 : f32 to vector<2x32xf32>
      %c0_9 = arith.constant 0 : index
      %c0_10 = arith.constant 0 : index
      %15 = vector.load %arg7[%c0_9, %c0_10] : memref<2x32xf32, #tpu.memory_space<vmem>>, vector<2x32xf32>
      tpu.vector_store %arg7[%c0_9, %c0_10], %14 {strides = array<i32>} : memref<2x32xf32, #tpu.memory_space<vmem>>, vector<2x32xf32>,
      %cst_11 = arith.constant 0.000000e+00 : f32
      %16 = vector.broadcast %cst_11 : f32 to vector<2x128xf32>
      %c0_12 = arith.constant 0 : index
      %c0_13 = arith.constant 0 : index
      %17 = vector.load %arg8[%c0_12, %c0_13] : memref<2x128xf32, #tpu.memory_space<vmem>>, vector<2x128xf32>
      tpu.vector_store %arg8[%c0_12, %c0_13], %16 {strides = array<i32>} : memref<2x128xf32, #tpu.memory_space<vmem>>, vector<2x128xf32>,
    } else {
    }
    %c0 = arith.constant 0 : index
    %c0_2 = arith.constant 0 : index
    %5 = vector.load %arg2[%c0, %c0_2] : memref<8x32xf32, #tpu.memory_space<vmem>>, vector<8x32xf32>
    %c0_3 = arith.constant 0 : index
    %c0_4 = arith.constant 0 : index
    %6 = vector.load %arg3[%c0_3, %c0_4] : memref<32x32xf32, #tpu.memory_space<vmem>>, vector<32x32xf32>
    %cst = arith.constant dense<0.000000e+00> : vector<8x32xf32>
    %7 = tpu.matmul %5, %6, %cst {dimension_numbers = #tpu.dot_dimension_numbers<[1], [0], [0], [1], [0, 0, 1, 1], [], []>} : vector<8x32xf32>, vector<32x32xf32>, vector<8x32xf32> -> vector<8x32xf32>
    %c0_i32_5 = arith.constant 0 : i32
    %8 = arith.cmpi eq, %arg0, %c0_i32_5 : i32
    %9 = arith.extui %8 : i1 to i32
    %c0_i32_6 = arith.constant 0 : i32
    %10 = arith.cmpi ne, %9, %c0_i32_6 : i32
    scf.if %10 {
      %c0_8 = arith.constant 0 : index
      %c0_9 = arith.constant 0 : index
      %14 = vector.load %arg7[%c0_8, %c0_9] : memref<2x32xf32, #tpu.memory_space<vmem>>, vector<1x32xf32>
      %cst_10 = arith.constant dense<0.000000e+00> : vector<32xf32>
      %15 = vector.multi_reduction <add>, %7, %cst_10 [0] : vector<8x32xf32> to vector<32xf32>
      %16 = vector.shape_cast %15 : vector<32xf32> to vector<1x32xf32>
      %17 = arith.addf %14, %16 : vector<1x32xf32>
      %c0_11 = arith.constant 0 : index
      %c0_12 = arith.constant 0 : index
      %18 = vector.load %arg7[%c0_11, %c0_12] : memref<2x32xf32, #tpu.memory_space<vmem>>, vector<1x32xf32>
      tpu.vector_store %arg7[%c0_11, %c0_12], %17 {strides = array<i32>} : memref<2x32xf32, #tpu.memory_space<vmem>>, vector<1x32xf32>,
      %c1 = arith.constant 1 : index
      %c0_13 = arith.constant 0 : index
      %19 = vector.load %arg7[%c1, %c0_13] : memref<2x32xf32, #tpu.memory_space<vmem>>, vector<1x32xf32>
      %20 = arith.mulf %7, %7 : vector<8x32xf32>
      %cst_14 = arith.constant dense<0.000000e+00> : vector<32xf32>
      %21 = vector.multi_reduction <add>, %20, %cst_14 [0] : vector<8x32xf32> to vector<32xf32>
      %22 = vector.shape_cast %21 : vector<32xf32> to vector<1x32xf32>
      %23 = arith.addf %19, %22 : vector<1x32xf32>
      %c1_15 = arith.constant 1 : index
      %c0_16 = arith.constant 0 : index
      %24 = vector.load %arg7[%c1_15, %c0_16] : memref<2x32xf32, #tpu.memory_space<vmem>>, vector<1x32xf32>
      tpu.vector_store %arg7[%c1_15, %c0_16], %23 {strides = array<i32>} : memref<2x32xf32, #tpu.memory_space<vmem>>, vector<1x32xf32>,
      %c0_i32_17 = arith.constant 0 : i32
      %25 = arith.cmpi eq, %arg1, %c0_i32_17 : i32
      %26 = arith.extui %25 : i1 to i32
      %c0_i32_18 = arith.constant 0 : i32
      %27 = arith.cmpi ne, %26, %c0_i32_18 : i32
      scf.if %27 {
        %c0_19 = arith.constant 0 : index
        %c0_20 = arith.constant 0 : index
        %28 = vector.load %arg7[%c0_19, %c0_20] : memref<2x32xf32, #tpu.memory_space<vmem>>, vector<1x32xf32>
        %cst_21 = arith.constant 1.250000e-01 : f32
        %29 = vector.broadcast %cst_21 : f32 to vector<1x32xf32>
        %30 = arith.mulf %28, %29 : vector<1x32xf32>
        %c1_22 = arith.constant 1 : index
        %c0_23 = arith.constant 0 : index
        %31 = vector.load %arg7[%c1_22, %c0_23] : memref<2x32xf32, #tpu.memory_space<vmem>>, vector<1x32xf32>
        %cst_24 = arith.constant 1.250000e-01 : f32
        %32 = vector.broadcast %cst_24 : f32 to vector<1x32xf32>
        %33 = arith.mulf %31, %32 : vector<1x32xf32>
        %34 = arith.mulf %30, %30 : vector<1x32xf32>
        %35 = arith.subf %33, %34 : vector<1x32xf32>
        %c0_25 = arith.constant 0 : index
        %c0_26 = arith.constant 0 : index
        %36 = vector.load %arg7[%c0_25, %c0_26] : memref<2x32xf32, #tpu.memory_space<vmem>>, vector<1x32xf32>
        tpu.vector_store %arg7[%c0_25, %c0_26], %30 {strides = array<i32>} : memref<2x32xf32, #tpu.memory_space<vmem>>, vector<1x32xf32>,
        %cst_27 = arith.constant 9.99999974E-6 : f32
        %37 = vector.broadcast %cst_27 : f32 to vector<1x32xf32>
        %38 = arith.addf %35, %37 : vector<1x32xf32>
        %39 = math.rsqrt %38 : vector<1x32xf32>
        %c1_28 = arith.constant 1 : index
        %c0_29 = arith.constant 0 : index
        %40 = vector.load %arg7[%c1_28, %c0_29] : memref<2x32xf32, #tpu.memory_space<vmem>>, vector<1x32xf32>
        tpu.vector_store %arg7[%c1_28, %c0_29], %39 {strides = array<i32>} : memref<2x32xf32, #tpu.memory_space<vmem>>, vector<1x32xf32>,
      } else {
      }
    } else {
    }
    %c1_i32 = arith.constant 1 : i32
    %11 = arith.cmpi eq, %arg0, %c1_i32 : i32
    %12 = arith.extui %11 : i1 to i32
    %c0_i32_7 = arith.constant 0 : i32
    %13 = arith.cmpi ne, %12, %c0_i32_7 : i32
    scf.if %13 {
      %c0_8 = arith.constant 0 : index
      %c0_9 = arith.constant 0 : index
      %14 = vector.load %arg7[%c0_8, %c0_9] : memref<2x32xf32, #tpu.memory_space<vmem>>, vector<1x32xf32>
      %15 = vector.broadcast %14 : vector<1x32xf32> to vector<8x32xf32>
      %16 = arith.subf %7, %15 : vector<8x32xf32>
      %c1 = arith.constant 1 : index
      %c0_10 = arith.constant 0 : index
      %17 = vector.load %arg7[%c1, %c0_10] : memref<2x32xf32, #tpu.memory_space<vmem>>, vector<1x32xf32>
      %18 = vector.broadcast %17 : vector<1x32xf32> to vector<8x32xf32>
      %19 = arith.mulf %16, %18 : vector<8x32xf32>
      %c0_11 = arith.constant 0 : index
      %c0_12 = arith.constant 0 : index
      %20 = vector.load %arg4[%c0_11, %c0_12] : memref<1x32xf32, #tpu.memory_space<vmem>>, vector<1x32xf32>
      %21 = vector.broadcast %20 : vector<1x32xf32> to vector<8x32xf32>
      %22 = arith.mulf %19, %21 : vector<8x32xf32>
      %c0_13 = arith.constant 0 : index
      %c0_14 = arith.constant 0 : index
      %23 = vector.load %arg5[%c0_13, %c0_14] : memref<1x32xf32, #tpu.memory_space<vmem>>, vector<1x32xf32>
      %24 = vector.broadcast %23 : vector<1x32xf32> to vector<8x32xf32>
      %25 = arith.addf %22, %24 : vector<8x32xf32>
      %cst_15 = arith.constant 0.000000e+00 : f32
      %26 = vector.broadcast %cst_15 : f32 to vector<8x32xf32>
      %27 = arith.maximumf %25, %26 : vector<8x32xf32>
      %c0_16 = arith.constant 0 : index
      %c0_17 = arith.constant 0 : index
      %28 = vector.load %arg6[%c0_16, %c0_17] : memref<32x128xf32, #tpu.memory_space<vmem>>, vector<32x128xf32>
      %cst_18 = arith.constant dense<0.000000e+00> : vector<8x128xf32>
      %29 = tpu.matmul %27, %28, %cst_18 {dimension_numbers = #tpu.dot_dimension_numbers<[1], [0], [0], [1], [0, 0, 1, 1], [], []>} : vector<8x32xf32>, vector<32x128xf32>, vector<8x128xf32> -> vector<8x128xf32>
      %c0_19 = arith.constant 0 : index
      %c0_20 = arith.constant 0 : index
      %30 = vector.load %arg8[%c0_19, %c0_20] : memref<2x128xf32, #tpu.memory_space<vmem>>, vector<1x128xf32>
      %cst_21 = arith.constant dense<0.000000e+00> : vector<128xf32>
      %31 = vector.multi_reduction <add>, %29, %cst_21 [0] : vector<8x128xf32> to vector<128xf32>
      %32 = vector.shape_cast %31 : vector<128xf32> to vector<1x128xf32>
      %33 = arith.addf %30, %32 : vector<1x128xf32>
      %c0_22 = arith.constant 0 : index
      %c0_23 = arith.constant 0 : index
      %34 = vector.load %arg8[%c0_22, %c0_23] : memref<2x128xf32, #tpu.memory_space<vmem>>, vector<1x128xf32>
      tpu.vector_store %arg8[%c0_22, %c0_23], %33 {strides = array<i32>} : memref<2x128xf32, #tpu.memory_space<vmem>>, vector<1x128xf32>,
      %c1_24 = arith.constant 1 : index
      %c0_25 = arith.constant 0 : index
      %35 = vector.load %arg8[%c1_24, %c0_25] : memref<2x128xf32, #tpu.memory_space<vmem>>, vector<1x128xf32>
      %36 = arith.mulf %29, %29 : vector<8x128xf32>
      %cst_26 = arith.constant dense<0.000000e+00> : vector<128xf32>
      %37 = vector.multi_reduction <add>, %36, %cst_26 [0] : vector<8x128xf32> to vector<128xf32>
      %38 = vector.shape_cast %37 : vector<128xf32> to vector<1x128xf32>
      %39 = arith.addf %35, %38 : vector<1x128xf32>
      %c1_27 = arith.constant 1 : index
      %c0_28 = arith.constant 0 : index
      %40 = vector.load %arg8[%c1_27, %c0_28] : memref<2x128xf32, #tpu.memory_space<vmem>>, vector<1x128xf32>
      tpu.vector_store %arg8[%c1_27, %c0_28], %39 {strides = array<i32>} : memref<2x128xf32, #tpu.memory_space<vmem>>, vector<1x128xf32>,
      %c0_i32_29 = arith.constant 0 : i32
      %41 = arith.cmpi eq, %arg1, %c0_i32_29 : i32
      %42 = arith.extui %41 : i1 to i32
      %c0_i32_30 = arith.constant 0 : i32
      %43 = arith.cmpi ne, %42, %c0_i32_30 : i32
      scf.if %43 {
        %c0_31 = arith.constant 0 : index
        %c0_32 = arith.constant 0 : index
        %44 = vector.load %arg8[%c0_31, %c0_32] : memref<2x128xf32, #tpu.memory_space<vmem>>, vector<1x128xf32>
        %cst_33 = arith.constant 1.250000e-01 : f32
        %45 = vector.broadcast %cst_33 : f32 to vector<1x128xf32>
        %46 = arith.mulf %44, %45 : vector<1x128xf32>
        %c1_34 = arith.constant 1 : index
        %c0_35 = arith.constant 0 : index
        %47 = vector.load %arg8[%c1_34, %c0_35] : memref<2x128xf32, #tpu.memory_space<vmem>>, vector<1x128xf32>
        %cst_36 = arith.constant 1.250000e-01 : f32
        %48 = vector.broadcast %cst_36 : f32 to vector<1x128xf32>
        %49 = arith.mulf %47, %48 : vector<1x128xf32>
        %50 = arith.mulf %46, %46 : vector<1x128xf32>
        %51 = arith.subf %49, %50 : vector<1x128xf32>
        %c0_37 = arith.constant 0 : index
        %c0_38 = arith.constant 0 : index
        %52 = vector.load %arg8[%c0_37, %c0_38] : memref<2x128xf32, #tpu.memory_space<vmem>>, vector<1x128xf32>
        tpu.vector_store %arg8[%c0_37, %c0_38], %46 {strides = array<i32>} : memref<2x128xf32, #tpu.memory_space<vmem>>, vector<1x128xf32>,
        %cst_39 = arith.constant 9.99999974E-6 : f32
        %53 = vector.broadcast %cst_39 : f32 to vector<1x128xf32>
        %54 = arith.addf %51, %53 : vector<1x128xf32>
        %55 = math.rsqrt %54 : vector<1x128xf32>
        %c1_40 = arith.constant 1 : index
        %c0_41 = arith.constant 0 : index
        %56 = vector.load %arg8[%c1_40, %c0_41] : memref<2x128xf32, #tpu.memory_space<vmem>>, vector<1x128xf32>
        tpu.vector_store %arg8[%c1_40, %c0_41], %55 {strides = array<i32>} : memref<2x128xf32, #tpu.memory_space<vmem>>, vector<1x128xf32>,
      } else {
      }
    } else {
    }
    return
  }
  func.func @transform_0(%arg0: i32, %arg1: i32) -> (i32, i32) {
    %c0_i32 = arith.constant 0 : i32
    %c0_i32_0 = arith.constant 0 : i32
    return %arg1, %c0_i32 : i32, i32
  }
  func.func @transform_1(%arg0: i32, %arg1: i32) -> (i32, i32) {
    %c0_i32 = arith.constant 0 : i32
    %c0_i32_0 = arith.constant 0 : i32
    %c0_i32_1 = arith.constant 0 : i32
    return %c0_i32, %c0_i32_0 : i32, i32
  }
  func.func @transform_2(%arg0: i32, %arg1: i32) -> (i32, i32) {
    %c0_i32 = arith.constant 0 : i32
    %c0_i32_0 = arith.constant 0 : i32
    %c0_i32_1 = arith.constant 0 : i32
    return %c0_i32, %c0_i32_0 : i32, i32
  }
  func.func @transform_3(%arg0: i32, %arg1: i32) -> (i32, i32) {
    %c0_i32 = arith.constant 0 : i32
    %c0_i32_0 = arith.constant 0 : i32
    %c0_i32_1 = arith.constant 0 : i32
    return %c0_i32, %c0_i32_0 : i32, i32
  }
  func.func @transform_4(%arg0: i32, %arg1: i32) -> (i32, i32) {
    %c0_i32 = arith.constant 0 : i32
    %c0_i32_0 = arith.constant 0 : i32
    %c0_i32_1 = arith.constant 0 : i32
    return %c0_i32, %c0_i32_0 : i32, i32
  }
  func.func @transform_5(%arg0: i32, %arg1: i32) -> (i32, i32) {
    %c0_i32 = arith.constant 0 : i32
    %c0_i32_0 = arith.constant 0 : i32
    %c0_i32_1 = arith.constant 0 : i32
    return %c0_i32, %c0_i32_0 : i32, i32
  }
  func.func @transform_6(%arg0: i32, %arg1: i32) -> (i32, i32) {
    %c0_i32 = arith.constant 0 : i32
    %c0_i32_0 = arith.constant 0 : i32
    %c0_i32_1 = arith.constant 0 : i32
    return %c0_i32, %c0_i32_0 : i32, i32
  }
}

module attributes {stable_mosaic.version = 11 : i64} {
  func.func @_normalize_kernel(%arg0: i32, %arg1: memref<8x32xf32, #tpu.memory_space<vmem>>, %arg2: memref<32x32xf32, #tpu.memory_space<vmem>>, %arg3: memref<1x32xf32, #tpu.memory_space<vmem>>, %arg4: memref<1x32xf32, #tpu.memory_space<vmem>>, %arg5: memref<32x128xf32, #tpu.memory_space<vmem>>, %arg6: memref<2x32xf32, #tpu.memory_space<vmem>>, %arg7: memref<2x128xf32, #tpu.memory_space<vmem>>, %arg8: memref<8x128xf32, #tpu.memory_space<vmem>>) attributes {dimension_semantics = [#tpu.dimension_semantics<parallel>], iteration_bounds = array<i64: 1>, scalar_prefetch = 0 : i64, scratch_operands = 0 : i64, tpu.core_type = #tpu.core_type<tc>, window_params = [{transform_indices = @transform_0, window_bounds = array<i64: 8, 32>}, {pipeline_mode = #tpu.pipeline_mode<synchronous>, transform_indices = @transform_1, window_bounds = array<i64: 32, 32>}, {pipeline_mode = #tpu.pipeline_mode<synchronous>, transform_indices = @transform_2, window_bounds = array<i64: 1, 32>}, {pipeline_mode = #tpu.pipeline_mode<synchronous>, transform_indices = @transform_3, window_bounds = array<i64: 1, 32>}, {pipeline_mode = #tpu.pipeline_mode<synchronous>, transform_indices = @transform_4, window_bounds = array<i64: 32, 128>}, {pipeline_mode = #tpu.pipeline_mode<synchronous>, transform_indices = @transform_5, window_bounds = array<i64: 2, 32>}, {pipeline_mode = #tpu.pipeline_mode<synchronous>, transform_indices = @transform_6, window_bounds = array<i64: 2, 128>}, {transform_indices = @transform_7, window_bounds = array<i64: 8, 128>}]} {
    %c0 = arith.constant 0 : index
    %c0_0 = arith.constant 0 : index
    %0 = vector.load %arg1[%c0, %c0_0] : memref<8x32xf32, #tpu.memory_space<vmem>>, vector<8x32xf32>
    %c0_1 = arith.constant 0 : index
    %c0_2 = arith.constant 0 : index
    %1 = vector.load %arg2[%c0_1, %c0_2] : memref<32x32xf32, #tpu.memory_space<vmem>>, vector<32x32xf32>
    %cst = arith.constant dense<0.000000e+00> : vector<8x32xf32>
    %2 = tpu.matmul %0, %1, %cst {dimension_numbers = #tpu.dot_dimension_numbers<[1], [0], [0], [1], [0, 0, 1, 1], [], []>} : vector<8x32xf32>, vector<32x32xf32>, vector<8x32xf32> -> vector<8x32xf32>
    %c0_3 = arith.constant 0 : index
    %c0_4 = arith.constant 0 : index
    %3 = vector.load %arg6[%c0_3, %c0_4] : memref<2x32xf32, #tpu.memory_space<vmem>>, vector<1x32xf32>
    %4 = vector.broadcast %3 : vector<1x32xf32> to vector<8x32xf32>
    %5 = arith.subf %2, %4 : vector<8x32xf32>
    %c1 = arith.constant 1 : index
    %c0_5 = arith.constant 0 : index
    %6 = vector.load %arg6[%c1, %c0_5] : memref<2x32xf32, #tpu.memory_space<vmem>>, vector<1x32xf32>
    %7 = vector.broadcast %6 : vector<1x32xf32> to vector<8x32xf32>
    %8 = arith.mulf %5, %7 : vector<8x32xf32>
    %c0_6 = arith.constant 0 : index
    %c0_7 = arith.constant 0 : index
    %9 = vector.load %arg3[%c0_6, %c0_7] : memref<1x32xf32, #tpu.memory_space<vmem>>, vector<1x32xf32>
    %10 = vector.broadcast %9 : vector<1x32xf32> to vector<8x32xf32>
    %11 = arith.mulf %8, %10 : vector<8x32xf32>
    %c0_8 = arith.constant 0 : index
    %c0_9 = arith.constant 0 : index
    %12 = vector.load %arg4[%c0_8, %c0_9] : memref<1x32xf32, #tpu.memory_space<vmem>>, vector<1x32xf32>
    %13 = vector.broadcast %12 : vector<1x32xf32> to vector<8x32xf32>
    %14 = arith.addf %11, %13 : vector<8x32xf32>
    %cst_10 = arith.constant 0.000000e+00 : f32
    %15 = vector.broadcast %cst_10 : f32 to vector<8x32xf32>
    %16 = arith.maximumf %14, %15 : vector<8x32xf32>
    %c0_11 = arith.constant 0 : index
    %c0_12 = arith.constant 0 : index
    %17 = vector.load %arg5[%c0_11, %c0_12] : memref<32x128xf32, #tpu.memory_space<vmem>>, vector<32x128xf32>
    %cst_13 = arith.constant dense<0.000000e+00> : vector<8x128xf32>
    %18 = tpu.matmul %16, %17, %cst_13 {dimension_numbers = #tpu.dot_dimension_numbers<[1], [0], [0], [1], [0, 0, 1, 1], [], []>} : vector<8x32xf32>, vector<32x128xf32>, vector<8x128xf32> -> vector<8x128xf32>
    %c0_14 = arith.constant 0 : index
    %c0_15 = arith.constant 0 : index
    %19 = vector.load %arg7[%c0_14, %c0_15] : memref<2x128xf32, #tpu.memory_space<vmem>>, vector<1x128xf32>
    %20 = vector.broadcast %19 : vector<1x128xf32> to vector<8x128xf32>
    %21 = arith.subf %18, %20 : vector<8x128xf32>
    %c1_16 = arith.constant 1 : index
    %c0_17 = arith.constant 0 : index
    %22 = vector.load %arg7[%c1_16, %c0_17] : memref<2x128xf32, #tpu.memory_space<vmem>>, vector<1x128xf32>
    %23 = vector.broadcast %22 : vector<1x128xf32> to vector<8x128xf32>
    %24 = arith.mulf %21, %23 : vector<8x128xf32>
    %c0_18 = arith.constant 0 : index
    %c0_19 = arith.constant 0 : index
    %25 = vector.load %arg8[%c0_18, %c0_19] : memref<8x128xf32, #tpu.memory_space<vmem>>, vector<8x128xf32>
    tpu.vector_store %arg8[%c0_18, %c0_19], %24 {strides = array<i32>} : memref<8x128xf32, #tpu.memory_space<vmem>>, vector<8x128xf32>,
    return
  }
  func.func @transform_0(%arg0: i32) -> (i32, i32) {
    %c0_i32 = arith.constant 0 : i32
    %c0_i32_0 = arith.constant 0 : i32
    return %arg0, %c0_i32 : i32, i32
  }
  func.func @transform_1(%arg0: i32) -> (i32, i32) {
    %c0_i32 = arith.constant 0 : i32
    %c0_i32_0 = arith.constant 0 : i32
    %c0_i32_1 = arith.constant 0 : i32
    return %c0_i32, %c0_i32_0 : i32, i32
  }
  func.func @transform_2(%arg0: i32) -> (i32, i32) {
    %c0_i32 = arith.constant 0 : i32
    %c0_i32_0 = arith.constant 0 : i32
    %c0_i32_1 = arith.constant 0 : i32
    return %c0_i32, %c0_i32_0 : i32, i32
  }
  func.func @transform_3(%arg0: i32) -> (i32, i32) {
    %c0_i32 = arith.constant 0 : i32
    %c0_i32_0 = arith.constant 0 : i32
    %c0_i32_1 = arith.constant 0 : i32
    return %c0_i32, %c0_i32_0 : i32, i32
  }
  func.func @transform_4(%arg0: i32) -> (i32, i32) {
    %c0_i32 = arith.constant 0 : i32
    %c0_i32_0 = arith.constant 0 : i32
    %c0_i32_1 = arith.constant 0 : i32
    return %c0_i32, %c0_i32_0 : i32, i32
  }
  func.func @transform_5(%arg0: i32) -> (i32, i32) {
    %c0_i32 = arith.constant 0 : i32
    %c0_i32_0 = arith.constant 0 : i32
    %c0_i32_1 = arith.constant 0 : i32
    return %c0_i32, %c0_i32_0 : i32, i32
  }
  func.func @transform_6(%arg0: i32) -> (i32, i32) {
    %c0_i32 = arith.constant 0 : i32
    %c0_i32_0 = arith.constant 0 : i32
    %c0_i32_1 = arith.constant 0 : i32
    return %c0_i32, %c0_i32_0 : i32, i32
  }
  func.func @transform_7(%arg0: i32) -> (i32, i32) {
    %c0_i32 = arith.constant 0 : i32
    %c0_i32_0 = arith.constant 0 : i32
    return %arg0, %c0_i32 : i32, i32
  }
}

</mosaic_0001>

<llo_original>
// kernel: critic_forward.2
$region0: #{critic_forward.2}
  #allocation0 [shape = 'u32[]', space=smem, size = 0x4, offset = 0x4, fixed_abs, tag = 'smem constant byte address 0x4 - core index']
  #allocation1 [shape = 'u32[144,128]{1,0:T(1,128)}', space=vmem, size = 0x12000, scoped, tag = 'internal scratch']
  %s0 = inlined_call_operand.hbm [shape: f32[8,32], index: 0, kind: input, shape index: {}]
  %s1 = inlined_call_operand.hbm [shape: f32[32,32], index: 1, kind: input, shape index: {}]
  %s2 = inlined_call_operand.vmem [shape: f32[1,32], index: 2, kind: input, shape index: {}]
  %s3 = inlined_call_operand.vmem [shape: f32[1,32], index: 3, kind: input, shape index: {}]
  %s4 = inlined_call_operand.hbm [shape: f32[32,128], index: 4, kind: input, shape index: {}]
  %s5 = inlined_call_operand.vmem [shape: f32[2,32], index: 5, kind: output, shape index: {0}]
  %s6 = inlined_call_operand.vmem [shape: f32[2,128], index: 6, kind: output, shape index: {1}]
  %7 = xla_tuple %s5, %s6
  %s8 = sld [smem:[#allocation0]]
  $region93: #{critic_forward.2} parent=0
    _
  %s10 = ssub.s32 1, %s8
  %s11 = scalar_select 0, %s10, %s8
  $region1: #{critic_forward.2} parent=0
    #allocation2 [shape = 'u8[4096]{0}', space=vmem, size = 0x1000, scoped, tag = 'input window, operand 0, single buffered']
    #allocation3 [shape = 's32[2]{0}', space=sflag, size = 0x8, scoped, tag = 'scoped memory for critic_forward.2']
    #allocation4 [shape = 'u8[16384]{0}', space=vmem, size = 0x4000, scoped, tag = 'input window, operand 1, single buffered']
    #allocation5 [shape = 's32[1]{0}', space=sflag, size = 0x4, scoped, tag = 'scoped memory for critic_forward.2']
    #allocation6 [shape = 'u8[16384]{0}', space=vmem, size = 0x4000, scoped, tag = 'input window, operand 4, single buffered']
    %12 = vsyncpa [#allocation3], 0
    %13 = vsyncpa [#allocation5], 0
    loop: start=0, step=1, limit=4
    $region2: #{critic_forward.2} parent=1 // loop_pre_header
      _
    $region3: #{critic_forward.2} parent=1 // loop_header
      %s15 = sphi 0, %s19
      %p16 = scmp.ge.s32.totalorder %s15, 4
      %s22 = sphi 0, %s34
      %s23 = sphi 0, %s30
      %s24 = sphi 0, %s22
      %s25 = sphi 0, %s23
      %s26 = sphi 0, %s24
      %s27 = sphi 0, %s25
      %s37 = sphi 0, %s39
      %s40 = sphi 0, %s37
      %s41 = sphi 0, %s40
      %s57 = sphi 0, %s41
      %s61 = sphi 0, %s61
      %s63 = sphi 0, %s61
      %s64 = sphi 0, %s63
      %s78 = sphi 0, %s64
      %s82 = sphi 0, %s82
      %s84 = sphi 0, %s82
      %s85 = sphi 0, %s84
      %s99 = sphi 0, %s85
      %s103 = sphi 0, %s103
      %s105 = sphi 0, %s103
      %s106 = sphi 0, %s105
      %s120 = sphi 0, %s106
      %s124 = sphi 0, %s124
      %s126 = sphi 0, %s124
      %s127 = sphi 0, %s126
      %s141 = sphi 0, %s127
      %s145 = sphi 0, %s145
      %s147 = sphi 0, %s145
      %s148 = sphi 0, %s147
      %s162 = sphi 0, %s148
      %s166 = sphi 0, %s166
      %s168 = sphi 0, %s166
      %s169 = sphi 0, %s168
      %s183 = sphi 0, %s169
    $region4: #{critic_forward.2} parent=1 // loop_header_branch
      %18 = sbr.rel (%p16) target = $region8
    $region5: #{critic_forward.2} parent=1 // loop_body
      %s20 = ssub.s32 %s15, 1
      %s21 = ssub.s32 %s15, 2
      %s28 = sadd.s32 1, %s23
      %p29 = scmp.ge.s32.totalorder %s28, 1
      %s30 = scalar_select %p29, 0, %s28
      %s31 = sadd.s32 1, %s22
      %s32 = scalar_select %p29, %s31, %s22
      %p33 = scmp.ge.s32.totalorder %s32, 2
      %s34 = scalar_select %p33, 0, %s32
      %s35 = ssub.s32 %s23, %s30
      %p36 = scmp.eq.s32.totalorder %s35, 0
      %s38 = sadd.s32 %s37, 1
      %s39 = scalar_select %p36, %s37, %s38
      %p42 = pneg %p36
      %p43 = scmp.eq.s32.totalorder %s15, 1
      %p44 = por %p42, %p43
      %p45 = scmp.ne.s32.totalorder %s37, %s40
      %p46 = scmp.eq.s32.totalorder %s15, 0
      %p47 = por %p45, %p46
      %p48 = scmp.ne.s32.totalorder %s37, %s40
      %p49 = scmp.eq.s32.totalorder %s20, 1
      %p50 = por %p48, %p49
      %p51 = scmp.ne.s32.totalorder %s40, %s41
      %p52 = scmp.eq.s32.totalorder %s20, 0
      %p53 = por %p51, %p52
      %p54 = scmp.ne.s32.totalorder %s40, %s41
      %p55 = scmp.eq.s32.totalorder %s21, 1
      %p56 = por %p54, %p55
      %p58 = scmp.ne.s32.totalorder %s41, %s57
      %p59 = scmp.eq.s32.totalorder %s21, 0
      %p60 = por %p58, %p59
      %s62 = sadd.s32 %s61, 1
      %p65 = scmp.eq.s32.totalorder %s15, 1
      %p66 = scmp.ne.s32.totalorder %s61, %s63
      %p67 = scmp.eq.s32.totalorder %s15, 0
      %p68 = por %p66, %p67
      %p69 = scmp.ne.s32.totalorder %s61, %s63
      %p70 = scmp.eq.s32.totalorder %s20, 1
      %p71 = por %p69, %p70
      %p72 = scmp.ne.s32.totalorder %s63, %s64
      %p73 = scmp.eq.s32.totalorder %s20, 0
      %p74 = por %p72, %p73
      %p75 = scmp.ne.s32.totalorder %s63, %s64
      %p76 = scmp.eq.s32.totalorder %s21, 1
      %p77 = por %p75, %p76
      %p79 = scmp.ne.s32.totalorder %s64, %s78
      %p80 = scmp.eq.s32.totalorder %s21, 0
      %p81 = por %p79, %p80
      %s83 = sadd.s32 %s82, 1
      %p86 = scmp.eq.s32.totalorder %s15, 1
      %p87 = scmp.ne.s32.totalorder %s82, %s84
      %p88 = scmp.eq.s32.totalorder %s15, 0
      %p89 = por %p87, %p88
      %p90 = scmp.ne.s32.totalorder %s82, %s84
      %p91 = scmp.eq.s32.totalorder %s20, 1
      %p92 = por %p90, %p91
      %p93 = scmp.ne.s32.totalorder %s84, %s85
      %p94 = scmp.eq.s32.totalorder %s20, 0
      %p95 = por %p93, %p94
      %p96 = scmp.ne.s32.totalorder %s84, %s85
      %p97 = scmp.eq.s32.totalorder %s21, 1
      %p98 = por %p96, %p97
      %p100 = scmp.ne.s32.totalorder %s85, %s99
      %p101 = scmp.eq.s32.totalorder %s21, 0
      %p102 = por %p100, %p101
      %s104 = sadd.s32 %s103, 1
      %p107 = scmp.eq.s32.totalorder %s15, 1
      %p108 = scmp.ne.s32.totalorder %s103, %s105
      %p109 = scmp.eq.s32.totalorder %s15, 0
      %p110 = por %p108, %p109
      %p111 = scmp.ne.s32.totalorder %s103, %s105
      %p112 = scmp.eq.s32.totalorder %s20, 1
      %p113 = por %p111, %p112
      %p114 = scmp.ne.s32.totalorder %s105, %s106
      %p115 = scmp.eq.s32.totalorder %s20, 0
      %p116 = por %p114, %p115
      %p117 = scmp.ne.s32.totalorder %s105, %s106
      %p118 = scmp.eq.s32.totalorder %s21, 1
      %p119 = por %p117, %p118
      %p121 = scmp.ne.s32.totalorder %s106, %s120
      %p122 = scmp.eq.s32.totalorder %s21, 0
      %p123 = por %p121, %p122
      %s125 = sadd.s32 %s124, 1
      %p128 = scmp.eq.s32.totalorder %s15, 1
      %p129 = scmp.ne.s32.totalorder %s124, %s126
      %p130 = scmp.eq.s32.totalorder %s15, 0
      %p131 = por %p129, %p130
      %p132 = scmp.ne.s32.totalorder %s124, %s126
      %p133 = scmp.eq.s32.totalorder %s20, 1
      %p134 = por %p132, %p133
      %p135 = scmp.ne.s32.totalorder %s126, %s127
      %p136 = scmp.eq.s32.totalorder %s20, 0
      %p137 = por %p135, %p136
      %p138 = scmp.ne.s32.totalorder %s126, %s127
      %p139 = scmp.eq.s32.totalorder %s21, 1
      %p140 = por %p138, %p139
      %p142 = scmp.ne.s32.totalorder %s127, %s141
      %p143 = scmp.eq.s32.totalorder %s21, 0
      %p144 = por %p142, %p143
      %s146 = sadd.s32 %s145, 1
      %p149 = scmp.eq.s32.totalorder %s15, 1
      %p150 = scmp.ne.s32.totalorder %s145, %s147
      %p151 = scmp.eq.s32.totalorder %s15, 0
      %p152 = por %p150, %p151
      %p153 = scmp.ne.s32.totalorder %s145, %s147
      %p154 = scmp.eq.s32.totalorder %s20, 1
      %p155 = por %p153, %p154
      %p156 = scmp.ne.s32.totalorder %s147, %s148
      %p157 = scmp.eq.s32.totalorder %s20, 0
      %p158 = por %p156, %p157
      %p159 = scmp.ne.s32.totalorder %s147, %s148
      %p160 = scmp.eq.s32.totalorder %s21, 1
      %p161 = por %p159, %p160
      %p163 = scmp.ne.s32.totalorder %s148, %s162
      %p164 = scmp.eq.s32.totalorder %s21, 0
      %p165 = por %p163, %p164
      %s167 = sadd.s32 %s166, 1
      %p170 = scmp.eq.s32.totalorder %s15, 1
      %p171 = scmp.ne.s32.totalorder %s166, %s168
      %p172 = scmp.eq.s32.totalorder %s15, 0
      %p173 = por %p171, %p172
      %p174 = scmp.ne.s32.totalorder %s166, %s168
      %p175 = scmp.eq.s32.totalorder %s20, 1
      %p176 = por %p174, %p175
      %p177 = scmp.ne.s32.totalorder %s168, %s169
      %p178 = scmp.eq.s32.totalorder %s20, 0
      %p179 = por %p177, %p178
      %p180 = scmp.ne.s32.totalorder %s168, %s169
      %p181 = scmp.eq.s32.totalorder %s21, 1
      %p182 = por %p180, %p181
      %p184 = scmp.ne.s32.totalorder %s169, %s183
      %p185 = scmp.eq.s32.totalorder %s21, 0
      %p186 = por %p184, %p185
      %p187 = scmp.le.s32.totalorder 1, %s15
      %p188 = scmp.lt.s32.totalorder %s15, 3
      %p189 = pnand %p187, %p188
      %p190 = pneg %p189
      // Predicated region
      $region9: #{critic_forward.2} parent=5 // pred_check
        _
      $region10: #{critic_forward.2} parent=5 // pred_check_branch
        %192 = sbr.rel (%p189) target = $region12
      $region11: #{critic_forward.2} parent=5 // pred_region
        %s193 = ssub.s32 %s15, 1
        // Predicated region
        $region13: #{critic_forward.2} parent=11 // pred_check
          %p194 = pneg %p53
        $region14: #{critic_forward.2} parent=11 // pred_check_branch
          %196 = sbr.rel (%p194) target = $region16
        $region15: #{critic_forward.2} parent=11 // pred_region
          %s198 = ssub.s32 128, 128
          %199 = vsyncadd [#allocation3], %s198
          %s200 = smul.addr %s25, 128
          %s201 = scalar_lea.hbm %s0, %s200
          %s203 = sshll.u32 [#allocation2], 4
          %s204 = int_to_ptr.vmem [resolvable:$true] %s203
          %206 = dma.hbm_to_vmem [thread:$0]  %s201, 128, %s204, [#allocation3]
        $region16: #{critic_forward.2} parent=11 // pred_fallthru
          _
        // Predicated region
        $region17: #{critic_forward.2} parent=11 // pred_check
          %p207 = pneg %p74
        $region18: #{critic_forward.2} parent=11 // pred_check_branch
          %209 = sbr.rel (%p207) target = $region20
        $region19: #{critic_forward.2} parent=11 // pred_region
          %s211 = ssub.s32 512, 512
          %212 = vsyncadd [#allocation5], %s211
          %s213 = sshll.u32 [#allocation4], 4
          %s214 = int_to_ptr.vmem [resolvable:$true] %s213
          %219 = dma.hbm_to_vmem [thread:$0]  %s1, 512, %s214, [#allocation5], 128, 128, 8
        $region20: #{critic_forward.2} parent=11 // pred_fallthru
          _
        // Predicated region
        $region21: #{critic_forward.2} parent=11 // pred_check
          %p220 = pneg %p95
        $region22: #{critic_forward.2} parent=11 // pred_check_branch
          %222 = sbr.rel (%p220) target = $region24
        $region23: #{critic_forward.2} parent=11 // pred_region
          _
        $region24: #{critic_forward.2} parent=11 // pred_fallthru
          _
        // Predicated region
        $region25: #{critic_forward.2} parent=11 // pred_check
          %p223 = pneg %p116
        $region26: #{critic_forward.2} parent=11 // pred_check_branch
          %225 = sbr.rel (%p223) target = $region28
        $region27: #{critic_forward.2} parent=11 // pred_region
          _
        $region28: #{critic_forward.2} parent=11 // pred_fallthru
          _
        // Predicated region
        $region29: #{critic_forward.2} parent=11 // pred_check
          %p226 = pneg %p137
        $region30: #{critic_forward.2} parent=11 // pred_check_branch
          %228 = sbr.rel (%p226) target = $region32
        $region31: #{critic_forward.2} parent=11 // pred_region
          %s230 = ssub.s32 512, 512
          %231 = vsyncadd [#allocation5], %s230
          %s232 = sshll.u32 [#allocation6], 4
          %s233 = int_to_ptr.vmem [resolvable:$true] %s232
          %238 = dma.hbm_to_vmem [thread:$0]  %s4, 512, %s233, [#allocation5], 128, 128, 8
        $region32: #{critic_forward.2} parent=11 // pred_fallthru
          _
      $region12: #{critic_forward.2} parent=5 // pred_fallthru
        _
      %p239 = scmp.lt.s32.totalorder %s15, 2
      // Predicated region
      $region33: #{critic_forward.2} parent=5 // pred_check
        %p240 = pneg %p239
      $region34: #{critic_forward.2} parent=5 // pred_check_branch
        %242 = sbr.rel (%p240) target = $region36
      $region35: #{critic_forward.2} parent=5 // pred_region
        _
      $region36: #{critic_forward.2} parent=5 // pred_fallthru
        _
      %p243 = scmp.le.s32.totalorder 1, %s15
      %p244 = scmp.lt.s32.totalorder %s15, 3
      %p245 = pnand %p243, %p244
      %p246 = pneg %p245
      // Predicated region
      $region37: #{critic_forward.2} parent=5 // pred_check
        _
      $region38: #{critic_forward.2} parent=5 // pred_check_branch
        %248 = sbr.rel (%p245) target = $region40
      $region39: #{critic_forward.2} parent=5 // pred_region
        %s249 = ssub.s32 %s15, 1
        // Predicated region
        $region41: #{critic_forward.2} parent=39 // pred_check
          %p250 = pneg %p53
        $region42: #{critic_forward.2} parent=39 // pred_check_branch
          %252 = sbr.rel (%p250) target = $region44
        $region43: #{critic_forward.2} parent=39 // pred_region
          %253 = dma.done [#allocation3], 128
        $region44: #{critic_forward.2} parent=39 // pred_fallthru
          _
        // Predicated region
        $region45: #{critic_forward.2} parent=39 // pred_check
          %p254 = pneg %p74
        $region46: #{critic_forward.2} parent=39 // pred_check_branch
          %256 = sbr.rel (%p254) target = $region48
        $region47: #{critic_forward.2} parent=39 // pred_region
          %257 = dma.done [#allocation5], 512
        $region48: #{critic_forward.2} parent=39 // pred_fallthru
          _
        // Predicated region
        $region49: #{critic_forward.2} parent=39 // pred_check
          %p258 = pneg %p137
        $region50: #{critic_forward.2} parent=39 // pred_check_branch
          %260 = sbr.rel (%p258) target = $region52
        $region51: #{critic_forward.2} parent=39 // pred_region
          %261 = dma.done [#allocation5], 512
        $region52: #{critic_forward.2} parent=39 // pred_fallthru
          _
        %p262 = pneg %p53
        %p263 = pneg %p50
        %p264 = pneg %p74
        %p265 = pneg %p71
        %p266 = pneg %p95
        %p267 = pneg %p92
        %p268 = pneg %p116
        %p269 = pneg %p113
        %p270 = pneg %p137
        %p271 = pneg %p134
        %p272 = pneg %p158
        %p273 = pneg %p155
        %p274 = pneg %p179
        %p275 = pneg %p176
        %p276 = scmp.eq.s32.totalorder %s24, 0
        %p277 = scmp.eq.s32.totalorder %s25, 0
        %p278 = pnand %p276, %p277
        %p279 = pneg %p278
        // Predicated region
        $region53: #{critic_forward.2} parent=39 // pred_check
          _
        $region54: #{critic_forward.2} parent=39 // pred_check_branch
          %281 = sbr.rel (%p278) target = $region56
        $region55: #{critic_forward.2} parent=39 // pred_region
          %vm282 = vcmask 254976
          %283 = vst.msk [vmem:[%s5] sm:$0x3] %vm282, 0.0
          %284 = vst [vmem:[%s6] sm:$0x3] 0.0
        $region56: #{critic_forward.2} parent=39 // pred_fallthru
          _
        %v285 = vld [vmem:[#allocation2] sm:$0xff]
        %v286 = vld [vmem:[#allocation4] sm:$0xff]
        %v287 = vld [vmem:[#allocation4 + $0x8] sm:$0xff]
        %v288 = vld [vmem:[#allocation4 + $0x10] sm:$0xff]
        %v289 = vld [vmem:[#allocation4 + $0x18] sm:$0xff]
        %vm290 = vcmask 261120
        %v292 = vsel %vm290, %v285, 0
        %294 = vmatprep.subr.mxu0 0.0
        %295 = vmatpush1.msra.mxu0 %v286
        %296 = vmatprep.subr.mxu0 0.0
        %297 = vmatpush1.msra.mxu0 %v287
        %298 = vmatprep.subr.mxu0 0.0
        %299 = vmatpush1.msra.mxu0 %v288
        %300 = vmatprep.subr.mxu0 0.0
        %301 = vmatpush1.msra.mxu0 %v289
        %302 = vmatprep.subr.mxu0 0.0
        %303 = vmatpush1.msra.mxu0 0.0
        %304 = vmatprep.subr.mxu0 0.0
        %305 = vmatpush1.msra.mxu0 0.0
        %306 = vmatprep.subr.mxu0 0.0
        %307 = vmatpush1.msra.mxu0 0.0
        %308 = vmatprep.subr.mxu0 0.0
        %309 = vmatpush1.msra.mxu0 0.0
        %310 = vmatprep.subr.mxu0 0.0
        %311 = vmatpush1.msra.mxu0 0.0
        %312 = vmatprep.subr.mxu0 0.0
        %313 = vmatpush1.msra.mxu0 0.0
        %314 = vmatprep.subr.mxu0 0.0
        %315 = vmatpush1.msra.mxu0 0.0
        %316 = vmatprep.subr.mxu0 0.0
        %317 = vmatpush1.msra.mxu0 0.0
        %318 = vmatprep.subr.mxu0 0.0
        %319 = vmatpush1.msra.mxu0 0.0
        %320 = vmatprep.subr.mxu0 0.0
        %321 = vmatpush1.msra.mxu0 0.0
        %322 = vmatprep.subr.mxu0 0.0
        %323 = vmatpush1.msra.mxu0 0.0
        %324 = vmatprep.subr.mxu0 0.0
        %325 = vmatpush1.msra.mxu0 0.0
        %326 = vmatprep.subr.mxu0 0.0
        %327 = vmatpush1.msra.mxu0 0.0
        %328 = vmatprep.subr.mxu0 0.0
        %329 = vmatpush1.msra.mxu0 0.0
        %330 = vmatprep.subr.mxu0 0.0
        %331 = vmatpush1.msra.mxu0 0.0
        %332 = vmatprep.subr.mxu0 0.0
        %333 = vmatpush1.msra.mxu0 0.0
        %334 = vmatprep.subr.mxu0 0.0
        %335 = vmatpush1.msra.mxu0 0.0
        %336 = vmatprep.subr.mxu0 0.0
        %337 = vmatpush1.msra.mxu0 0.0
        %338 = vmatprep.subr.mxu0 0.0
        %339 = vmatpush1.msra.mxu0 0.0
        %340 = vmatprep.subr.mxu0 0.0
        %341 = vmatpush1.msra.mxu0 0.0
        %342 = vmatprep.subr.mxu0 0.0
        %343 = vmatpush1.msra.mxu0 0.0
        %344 = vmatprep.subr.mxu0 0.0
        %345 = vmatpush1.msra.mxu0 0.0
        %346 = vmatprep.subr.mxu0 0.0
        %347 = vmatpush1.msra.mxu0 0.0
        %348 = vmatprep.subr.mxu0 0.0
        %349 = vmatpush1.msra.mxu0 0.0
        %350 = vmatprep.subr.mxu0 0.0
        %351 = vmatpush1.msra.mxu0 0.0
        %352 = vmatprep.subr.mxu0 0.0
        %353 = vmatpush1.msra.mxu0 0.0
        %354 = vmatprep.subr.mxu0 0.0
        %355 = vmatpush1.msra.mxu0 0.0
        %356 = vmatprep.subr.mxu0 0.0
        %357 = vmatpush1.msra.mxu0 0.0
        %358 = vmatprep.mubr.f32.mxu0 0.0
        %359 = vmatmul.mubr.f32.gmra.mrb[0].mxu0 %v292
        %v360 = vpop.f32.mrb[0].mxu0
        %v361 = vadd.f32 0.0, %v360
        %v362 = vpop.f32.mrb[0].mxu0
        %363 = vdwg.mxu0
        // Predicated region
        $region57: #{critic_forward.2} parent=39 // pred_check
          %p364 = pneg %p276
        $region58: #{critic_forward.2} parent=39 // pred_check_branch
          %366 = sbr.rel (%p364) target = $region60
        $region59: #{critic_forward.2} parent=39 // pred_region
          %v367 = vld [vmem:[%s5] sm:$0x1]
          %v368 = vsel %vm290, %v361, 0.0
          %v369 = vrot.slane %v368, 4
          %v370 = vadd.f32 %v368, %v369
          %v371 = vrot.slane %v370, 2
          %v372 = vadd.f32 %v370, %v371
          %v373 = vrot.slane %v372, 1
          %v374 = vadd.f32 %v372, %v373
          %v375 = vadd.f32 %v367, %v374
          %vm376 = vcmask 253952
          %377 = vst.msk [vmem:[%s5] sm:$0x1] %vm376, %v375
          %v378 = vld [vmem:[%s5 + $0x1] sm:$0x1]
          %v379 = vmul.f32 %v361, %v361
          %v380 = vsel %vm290, %v379, 0.0
          %v381 = vrot.slane %v380, 4
          %v382 = vadd.f32 %v380, %v381
          %v383 = vrot.slane %v382, 2
          %v384 = vadd.f32 %v382, %v383
          %v385 = vrot.slane %v384, 1
          %v386 = vadd.f32 %v384, %v385
          %v387 = vadd.f32 %v378, %v386
          %388 = vst.msk [vmem:[%s5 + $0x1] sm:$0x1] %vm376, %v387
          // Predicated region
          $region61: #{critic_forward.2} parent=59 // pred_check
            %p389 = pneg %p277
          $region62: #{critic_forward.2} parent=59 // pred_check_branch
            %391 = sbr.rel (%p389) target = $region64
          $region63: #{critic_forward.2} parent=59 // pred_region
            %v392 = vld [vmem:[%s5] sm:$0x1]
            %v393 = vmul.f32 %v392, 0.125
            %v394 = vld [vmem:[%s5 + $0x1] sm:$0x1]
            %v395 = vmul.f32 %v394, 0.125
            %v396 = vmul.f32 %v393, %v393
            %v397 = vsub.f32 %v395, %v396
            %398 = vst.msk [vmem:[%s5] sm:$0x1] %vm376, %v393
            %v399 = vadd.f32 %v397, 1e-05
            %v400 = vrsqrt.pop %v399
            %401 = vst.msk [vmem:[%s5 + $0x1] sm:$0x1] %vm376, %v400
          $region64: #{critic_forward.2} parent=59 // pred_fallthru
            _
        $region60: #{critic_forward.2} parent=39 // pred_fallthru
          _
        %p402 = scmp.eq.s32.totalorder %s24, 1
        // Predicated region
        $region65: #{critic_forward.2} parent=39 // pred_check
          %p403 = pneg %p402
        $region66: #{critic_forward.2} parent=39 // pred_check_branch
          %405 = sbr.rel (%p403) target = $region68
        $region67: #{critic_forward.2} parent=39 // pred_region
          %v406 = vld [vmem:[%s5] sm:$0x1]
          %v407 = vlaneseq
          %v408 = vshrl.u32 %v407, 7
          %v409 = vsub.s32 0, %v408
          %v410 = vrot.slane %v406, %v409
          %v411 = vsub.f32 %v361, %v410
          %v412 = vld [vmem:[%s5 + $0x1] sm:$0x1]
          %v413 = vlaneseq
          %v414 = vshrl.u32 %v413, 7
          %v415 = vsub.s32 0, %v414
          %v416 = vrot.slane %v412, %v415
          %v417 = vmul.f32 %v411, %v416
          %v418 = vld [vmem:[%s2] sm:$0x1]
          %v420 = vlaneseq
          %v421 = vshrl.u32 %v420, 7
          %v422 = vsub.s32 0, %v421
          %v423 = vrot.slane %v418, %v422
          %v425 = vmul.f32 %v417, %v423
          %v426 = vld [vmem:[%s3] sm:$0x1]
          %v428 = vlaneseq
          %v429 = vshrl.u32 %v428, 7
          %v430 = vsub.s32 0, %v429
          %v431 = vrot.slane %v426, %v430
          %v433 = vadd.f32 %v425, %v431
          %v434 = vmax.f32 %v433, 0.0
          %v435 = vld [vmem:[#allocation6] sm:$0xff]
          %v436 = vld [vmem:[#allocation6 + $0x8] sm:$0xff]
          %v437 = vld [vmem:[#allocation6 + $0x10] sm:$0xff]
          %v438 = vld [vmem:[#allocation6 + $0x18] sm:$0xff]
          %v440 = vsel %vm290, %v434, 0
          %442 = vmatprep.subr.mxu0 0.0
          %443 = vmatpush1.msra.mxu0 %v435
          %444 = vmatprep.subr.mxu0 0.0
          %445 = vmatpush1.msra.mxu0 %v436
          %446 = vmatprep.subr.mxu0 0.0
          %447 = vmatpush1.msra.mxu0 %v437
          %448 = vmatprep.subr.mxu0 0.0
          %449 = vmatpush1.msra.mxu0 %v438
          %450 = vmatprep.subr.mxu0 0.0
          %451 = vmatpush1.msra.mxu0 0.0
          %452 = vmatprep.subr.mxu0 0.0
          %453 = vmatpush1.msra.mxu0 0.0
          %454 = vmatprep.subr.mxu0 0.0
          %455 = vmatpush1.msra.mxu0 0.0
          %456 = vmatprep.subr.mxu0 0.0
          %457 = vmatpush1.msra.mxu0 0.0
          %458 = vmatprep.subr.mxu0 0.0
          %459 = vmatpush1.msra.mxu0 0.0
          %460 = vmatprep.subr.mxu0 0.0
          %461 = vmatpush1.msra.mxu0 0.0
          %462 = vmatprep.subr.mxu0 0.0
          %463 = vmatpush1.msra.mxu0 0.0
          %464 = vmatprep.subr.mxu0 0.0
          %465 = vmatpush1.msra.mxu0 0.0
          %466 = vmatprep.subr.mxu0 0.0
          %467 = vmatpush1.msra.mxu0 0.0
          %468 = vmatprep.subr.mxu0 0.0
          %469 = vmatpush1.msra.mxu0 0.0
          %470 = vmatprep.subr.mxu0 0.0
          %471 = vmatpush1.msra.mxu0 0.0
          %472 = vmatprep.subr.mxu0 0.0
          %473 = vmatpush1.msra.mxu0 0.0
          %474 = vmatprep.subr.mxu0 0.0
          %475 = vmatpush1.msra.mxu0 0.0
          %476 = vmatprep.subr.mxu0 0.0
          %477 = vmatpush1.msra.mxu0 0.0
          %478 = vmatprep.subr.mxu0 0.0
          %479 = vmatpush1.msra.mxu0 0.0
          %480 = vmatprep.subr.mxu0 0.0
          %481 = vmatpush1.msra.mxu0 0.0
          %482 = vmatprep.subr.mxu0 0.0
          %483 = vmatpush1.msra.mxu0 0.0
          %484 = vmatprep.subr.mxu0 0.0
          %485 = vmatpush1.msra.mxu0 0.0
          %486 = vmatprep.subr.mxu0 0.0
          %487 = vmatpush1.msra.mxu0 0.0
          %488 = vmatprep.subr.mxu0 0.0
          %489 = vmatpush1.msra.mxu0 0.0
          %490 = vmatprep.subr.mxu0 0.0
          %491 = vmatpush1.msra.mxu0 0.0
          %492 = vmatprep.subr.mxu0 0.0
          %493 = vmatpush1.msra.mxu0 0.0
          %494 = vmatprep.subr.mxu0 0.0
          %495 = vmatpush1.msra.mxu0 0.0
          %496 = vmatprep.subr.mxu0 0.0
          %497 = vmatpush1.msra.mxu0 0.0
          %498 = vmatprep.subr.mxu0 0.0
          %499 = vmatpush1.msra.mxu0 0.0
          %500 = vmatprep.subr.mxu0 0.0
          %501 = vmatpush1.msra.mxu0 0.0
          %502 = vmatprep.subr.mxu0 0.0
          %503 = vmatpush1.msra.mxu0 0.0
          %504 = vmatprep.subr.mxu0 0.0
          %505 = vmatpush1.msra.mxu0 0.0
          %506 = vmatprep.mubr.f32.mxu0 0.0
          %507 = vmatmul.mubr.f32.gmra.mrb[0].mxu0 %v440
          %v508 = vpop.f32.mrb[0].mxu0
          %v509 = vadd.f32 0.0, %v508
          %v510 = vpop.f32.mrb[0].mxu0
          %511 = vdwg.mxu0
          %v512 = vld [vmem:[%s6] sm:$0x1]
          %v513 = vrot.slane %v509, 4
          %v514 = vadd.f32 %v509, %v513
          %v515 = vrot.slane %v514, 2
          %v516 = vadd.f32 %v514, %v515
          %v517 = vrot.slane %v516, 1
          %v518 = vadd.f32 %v516, %v517
          %v519 = vadd.f32 %v512, %v518
          %520 = vst [vmem:[%s6] sm:$0x1] %v519
          %v521 = vld [vmem:[%s6 + $0x1] sm:$0x1]
          %v522 = vmul.f32 %v509, %v509
          %v523 = vrot.slane %v522, 4
          %v524 = vadd.f32 %v522, %v523
          %v525 = vrot.slane %v524, 2
          %v526 = vadd.f32 %v524, %v525
          %v527 = vrot.slane %v526, 1
          %v528 = vadd.f32 %v526, %v527
          %v529 = vadd.f32 %v521, %v528
          %530 = vst [vmem:[%s6 + $0x1] sm:$0x1] %v529
          // Predicated region
          $region69: #{critic_forward.2} parent=67 // pred_check
            %p531 = pneg %p277
          $region70: #{critic_forward.2} parent=67 // pred_check_branch
            %533 = sbr.rel (%p531) target = $region72
          $region71: #{critic_forward.2} parent=67 // pred_region
            %v534 = vld [vmem:[%s6] sm:$0x1]
            %v535 = vmul.f32 %v534, 0.125
            %v536 = vld [vmem:[%s6 + $0x1] sm:$0x1]
            %v537 = vmul.f32 %v536, 0.125
            %v538 = vmul.f32 %v535, %v535
            %v539 = vsub.f32 %v537, %v538
            %540 = vst [vmem:[%s6] sm:$0x1] %v535
            %v541 = vadd.f32 %v539, 1e-05
            %v542 = vrsqrt.pop %v541
            %543 = vst [vmem:[%s6 + $0x1] sm:$0x1] %v542
          $region72: #{critic_forward.2} parent=67 // pred_fallthru
            _
        $region68: #{critic_forward.2} parent=39 // pred_fallthru
          _
        // Predicated region
        $region73: #{critic_forward.2} parent=39 // pred_check
          %p544 = pneg %p155
        $region74: #{critic_forward.2} parent=39 // pred_check_branch
          %546 = sbr.rel (%p544) target = $region76
        $region75: #{critic_forward.2} parent=39 // pred_region
          _
        $region76: #{critic_forward.2} parent=39 // pred_fallthru
          _
        // Predicated region
        $region77: #{critic_forward.2} parent=39 // pred_check
          %p547 = pneg %p176
        $region78: #{critic_forward.2} parent=39 // pred_check_branch
          %549 = sbr.rel (%p547) target = $region80
        $region79: #{critic_forward.2} parent=39 // pred_region
          _
        $region80: #{critic_forward.2} parent=39 // pred_fallthru
          _
        // Predicated region
        $region81: #{critic_forward.2} parent=39 // pred_check
          %p550 = pneg %p155
        $region82: #{critic_forward.2} parent=39 // pred_check_branch
          %552 = sbr.rel (%p550) target = $region84
        $region83: #{critic_forward.2} parent=39 // pred_region
          _
        $region84: #{critic_forward.2} parent=39 // pred_fallthru
          _
        // Predicated region
        $region85: #{critic_forward.2} parent=39 // pred_check
          %p553 = pneg %p176
        $region86: #{critic_forward.2} parent=39 // pred_check_branch
          %555 = sbr.rel (%p553) target = $region88
        $region87: #{critic_forward.2} parent=39 // pred_region
          _
        $region88: #{critic_forward.2} parent=39 // pred_fallthru
          _
      $region40: #{critic_forward.2} parent=5 // pred_fallthru
        _
      %p556 = scmp.le.s32.totalorder 2, %s15
      // Predicated region
      $region89: #{critic_forward.2} parent=5 // pred_check
        %p557 = pneg %p556
      $region90: #{critic_forward.2} parent=5 // pred_check_branch
        %559 = sbr.rel (%p557) target = $region92
      $region91: #{critic_forward.2} parent=5 // pred_region
        %s560 = ssub.s32 %s15, 2
      $region92: #{critic_forward.2} parent=5 // pred_fallthru
        _
    $region6: #{critic_forward.2} parent=1 // loop_footer
      %s19 = sadd.s32 1, %s15
    $region7: #{critic_forward.2} parent=1 // loop_footer_branch
      %14 = sbr.rel target = $region3
    $region8: #{critic_forward.2} parent=1 // loop_exit
      _
    %561 = vsyncpa [#allocation3], 1
    %s562 = scalar_lea.sflag [#allocation3], 1
    %563 = vsyncpa %s562, 1
    %564 = vsyncpa [#allocation5], 1

// kernel: critic_forward.3
$region0: #{critic_forward.3}
  #allocation0 [shape = 'u32[]', space=smem, size = 0x4, offset = 0x4, fixed_abs, tag = 'smem constant byte address 0x4 - core index']
  #allocation1 [shape = 'u32[144,128]{1,0:T(1,128)}', space=vmem, size = 0x12000, scoped, tag = 'internal scratch']
  %s0 = inlined_call_operand.vmem [shape: f32[8,32], index: 0, kind: input, shape index: {}]
  %s1 = inlined_call_operand.vmem [shape: f32[32,32], index: 1, kind: input, shape index: {}]
  %s2 = inlined_call_operand.vmem [shape: f32[1,32], index: 2, kind: input, shape index: {}]
  %s3 = inlined_call_operand.vmem [shape: f32[1,32], index: 3, kind: input, shape index: {}]
  %s4 = inlined_call_operand.vmem [shape: f32[32,128], index: 4, kind: input, shape index: {}]
  %s5 = inlined_call_operand.vmem [shape: f32[2,32], index: 5, kind: input, shape index: {}]
  %s6 = inlined_call_operand.vmem [shape: f32[2,128], index: 6, kind: input, shape index: {}]
  %s7 = inlined_call_operand.hbm [shape: f32[8,128], index: 7, kind: output, shape index: {}]
  %s8 = sld [smem:[#allocation0]]
  $region38: #{critic_forward.3} parent=0
    _
  %s10 = ssub.s32 1, %s8
  %s11 = scalar_select 0, %s10, %s8
  $region1: #{critic_forward.3} parent=0
    #allocation2 [shape = 'u8[4096]{0}', space=vmem, size = 0x1000, scoped, tag = 'output window, operand 0, single buffered']
    #allocation3 [shape = 's32[1]{0}', space=sflag, size = 0x4, scoped, tag = 'scoped memory for critic_forward.3']
    %12 = vsyncpa [#allocation3], 0
    // Predicated region
    $region2: #{critic_forward.3} parent=1 // pred_check
      _
    $region3: #{critic_forward.3} parent=1 // pred_check_branch
      %14 = sbr.rel (0) target = $region5
    $region4: #{critic_forward.3} parent=1 // pred_region
      _
    $region5: #{critic_forward.3} parent=1 // pred_fallthru
      _
    // Predicated region
    $region6: #{critic_forward.3} parent=1 // pred_check
      _
    $region7: #{critic_forward.3} parent=1 // pred_check_branch
      %16 = sbr.rel (0) target = $region9
    $region8: #{critic_forward.3} parent=1 // pred_region
      _
    $region9: #{critic_forward.3} parent=1 // pred_fallthru
      _
    // Predicated region
    $region10: #{critic_forward.3} parent=1 // pred_check
      _
    $region11: #{critic_forward.3} parent=1 // pred_check_branch
      %18 = sbr.rel (0) target = $region13
    $region12: #{critic_forward.3} parent=1 // pred_region
      _
    $region13: #{critic_forward.3} parent=1 // pred_fallthru
      _
    // Predicated region
    $region14: #{critic_forward.3} parent=1 // pred_check
      _
    $region15: #{critic_forward.3} parent=1 // pred_check_branch
      %20 = sbr.rel (0) target = $region17
    $region16: #{critic_forward.3} parent=1 // pred_region
      _
    $region17: #{critic_forward.3} parent=1 // pred_fallthru
      _
    // Predicated region
    $region18: #{critic_forward.3} parent=1 // pred_check
      _
    $region19: #{critic_forward.3} parent=1 // pred_check_branch
      %22 = sbr.rel (0) target = $region21
    $region20: #{critic_forward.3} parent=1 // pred_region
      _
    $region21: #{critic_forward.3} parent=1 // pred_fallthru
      _
    // Predicated region
    $region22: #{critic_forward.3} parent=1 // pred_check
      _
    $region23: #{critic_forward.3} parent=1 // pred_check_branch
      %24 = sbr.rel (0) target = $region25
    $region24: #{critic_forward.3} parent=1 // pred_region
      _
    $region25: #{critic_forward.3} parent=1 // pred_fallthru
      _
    // Predicated region
    $region26: #{critic_forward.3} parent=1 // pred_check
      _
    $region27: #{critic_forward.3} parent=1 // pred_check_branch
      %26 = sbr.rel (0) target = $region29
    $region28: #{critic_forward.3} parent=1 // pred_region
      _
    $region29: #{critic_forward.3} parent=1 // pred_fallthru
      _
    %v27 = vld [vmem:[%s0] sm:$0xff]
    %v28 = vld [vmem:[%s1] sm:$0xff]
    %v29 = vld [vmem:[%s1 + $0x8] sm:$0xff]
    %v30 = vld [vmem:[%s1 + $0x10] sm:$0xff]
    %v31 = vld [vmem:[%s1 + $0x18] sm:$0xff]
    %vm32 = vcmask 261120
    %v34 = vsel %vm32, %v27, 0
    %36 = vmatprep.subr.mxu0 0.0
    %37 = vmatpush1.msra.mxu0 %v28
    %38 = vmatprep.subr.mxu0 0.0
    %39 = vmatpush1.msra.mxu0 %v29
    %40 = vmatprep.subr.mxu0 0.0
    %41 = vmatpush1.msra.mxu0 %v30
    %42 = vmatprep.subr.mxu0 0.0
    %43 = vmatpush1.msra.mxu0 %v31
    %44 = vmatprep.subr.mxu0 0.0
    %45 = vmatpush1.msra.mxu0 0.0
    %46 = vmatprep.subr.mxu0 0.0
    %47 = vmatpush1.msra.mxu0 0.0
    %48 = vmatprep.subr.mxu0 0.0
    %49 = vmatpush1.msra.mxu0 0.0
    %50 = vmatprep.subr.mxu0 0.0
    %51 = vmatpush1.msra.mxu0 0.0
    %52 = vmatprep.subr.mxu0 0.0
    %53 = vmatpush1.msra.mxu0 0.0
    %54 = vmatprep.subr.mxu0 0.0
    %55 = vmatpush1.msra.mxu0 0.0
    %56 = vmatprep.subr.mxu0 0.0
    %57 = vmatpush1.msra.mxu0 0.0
    %58 = vmatprep.subr.mxu0 0.0
    %59 = vmatpush1.msra.mxu0 0.0
    %60 = vmatprep.subr.mxu0 0.0
    %61 = vmatpush1.msra.mxu0 0.0
    %62 = vmatprep.subr.mxu0 0.0
    %63 = vmatpush1.msra.mxu0 0.0
    %64 = vmatprep.subr.mxu0 0.0
    %65 = vmatpush1.msra.mxu0 0.0
    %66 = vmatprep.subr.mxu0 0.0
    %67 = vmatpush1.msra.mxu0 0.0
    %68 = vmatprep.subr.mxu0 0.0
    %69 = vmatpush1.msra.mxu0 0.0
    %70 = vmatprep.subr.mxu0 0.0
    %71 = vmatpush1.msra.mxu0 0.0
    %72 = vmatprep.subr.mxu0 0.0
    %73 = vmatpush1.msra.mxu0 0.0
    %74 = vmatprep.subr.mxu0 0.0
    %75 = vmatpush1.msra.mxu0 0.0
    %76 = vmatprep.subr.mxu0 0.0
    %77 = vmatpush1.msra.mxu0 0.0
    %78 = vmatprep.subr.mxu0 0.0
    %79 = vmatpush1.msra.mxu0 0.0
    %80 = vmatprep.subr.mxu0 0.0
    %81 = vmatpush1.msra.mxu0 0.0
    %82 = vmatprep.subr.mxu0 0.0
    %83 = vmatpush1.msra.mxu0 0.0
    %84 = vmatprep.subr.mxu0 0.0
    %85 = vmatpush1.msra.mxu0 0.0
    %86 = vmatprep.subr.mxu0 0.0
    %87 = vmatpush1.msra.mxu0 0.0
    %88 = vmatprep.subr.mxu0 0.0
    %89 = vmatpush1.msra.mxu0 0.0
    %90 = vmatprep.subr.mxu0 0.0
    %91 = vmatpush1.msra.mxu0 0.0
    %92 = vmatprep.subr.mxu0 0.0
    %93 = vmatpush1.msra.mxu0 0.0
    %94 = vmatprep.subr.mxu0 0.0
    %95 = vmatpush1.msra.mxu0 0.0
    %96 = vmatprep.subr.mxu0 0.0
    %97 = vmatpush1.msra.mxu0 0.0
    %98 = vmatprep.subr.mxu0 0.0
    %99 = vmatpush1.msra.mxu0 0.0
    %100 = vmatprep.mubr.f32.mxu0 0.0
    %101 = vmatmul.mubr.f32.gmra.mrb[0].mxu0 %v34
    %v102 = vpop.f32.mrb[0].mxu0
    %v103 = vadd.f32 0.0, %v102
    %v104 = vpop.f32.mrb[0].mxu0
    %105 = vdwg.mxu0
    %v106 = vld [vmem:[%s5] sm:$0x1]
    %v107 = vlaneseq
    %v108 = vshrl.u32 %v107, 7
    %v109 = vsub.s32 0, %v108
    %v110 = vrot.slane %v106, %v109
    %v111 = vsub.f32 %v103, %v110
    %v112 = vld [vmem:[%s5 + $0x1] sm:$0x1]
    %v113 = vlaneseq
    %v114 = vshrl.u32 %v113, 7
    %v115 = vsub.s32 0, %v114
    %v116 = vrot.slane %v112, %v115
    %v117 = vmul.f32 %v111, %v116
    %v118 = vld [vmem:[%s2] sm:$0x1]
    %v120 = vlaneseq
    %v121 = vshrl.u32 %v120, 7
    %v122 = vsub.s32 0, %v121
    %v123 = vrot.slane %v118, %v122
    %v125 = vmul.f32 %v117, %v123
    %v126 = vld [vmem:[%s3] sm:$0x1]
    %v128 = vlaneseq
    %v129 = vshrl.u32 %v128, 7
    %v130 = vsub.s32 0, %v129
    %v131 = vrot.slane %v126, %v130
    %v133 = vadd.f32 %v125, %v131
    %v134 = vmax.f32 %v133, 0.0
    %v135 = vld [vmem:[%s4] sm:$0xff]
    %v136 = vld [vmem:[%s4 + $0x8] sm:$0xff]
    %v137 = vld [vmem:[%s4 + $0x10] sm:$0xff]
    %v138 = vld [vmem:[%s4 + $0x18] sm:$0xff]
    %v140 = vsel %vm32, %v134, 0
    %142 = vmatprep.subr.mxu0 0.0
    %143 = vmatpush1.msra.mxu0 %v135
    %144 = vmatprep.subr.mxu0 0.0
    %145 = vmatpush1.msra.mxu0 %v136
    %146 = vmatprep.subr.mxu0 0.0
    %147 = vmatpush1.msra.mxu0 %v137
    %148 = vmatprep.subr.mxu0 0.0
    %149 = vmatpush1.msra.mxu0 %v138
    %150 = vmatprep.subr.mxu0 0.0
    %151 = vmatpush1.msra.mxu0 0.0
    %152 = vmatprep.subr.mxu0 0.0
    %153 = vmatpush1.msra.mxu0 0.0
    %154 = vmatprep.subr.mxu0 0.0
    %155 = vmatpush1.msra.mxu0 0.0
    %156 = vmatprep.subr.mxu0 0.0
    %157 = vmatpush1.msra.mxu0 0.0
    %158 = vmatprep.subr.mxu0 0.0
    %159 = vmatpush1.msra.mxu0 0.0
    %160 = vmatprep.subr.mxu0 0.0
    %161 = vmatpush1.msra.mxu0 0.0
    %162 = vmatprep.subr.mxu0 0.0
    %163 = vmatpush1.msra.mxu0 0.0
    %164 = vmatprep.subr.mxu0 0.0
    %165 = vmatpush1.msra.mxu0 0.0
    %166 = vmatprep.subr.mxu0 0.0
    %167 = vmatpush1.msra.mxu0 0.0
    %168 = vmatprep.subr.mxu0 0.0
    %169 = vmatpush1.msra.mxu0 0.0
    %170 = vmatprep.subr.mxu0 0.0
    %171 = vmatpush1.msra.mxu0 0.0
    %172 = vmatprep.subr.mxu0 0.0
    %173 = vmatpush1.msra.mxu0 0.0
    %174 = vmatprep.subr.mxu0 0.0
    %175 = vmatpush1.msra.mxu0 0.0
    %176 = vmatprep.subr.mxu0 0.0
    %177 = vmatpush1.msra.mxu0 0.0
    %178 = vmatprep.subr.mxu0 0.0
    %179 = vmatpush1.msra.mxu0 0.0
    %180 = vmatprep.subr.mxu0 0.0
    %181 = vmatpush1.msra.mxu0 0.0
    %182 = vmatprep.subr.mxu0 0.0
    %183 = vmatpush1.msra.mxu0 0.0
    %184 = vmatprep.subr.mxu0 0.0
    %185 = vmatpush1.msra.mxu0 0.0
    %186 = vmatprep.subr.mxu0 0.0
    %187 = vmatpush1.msra.mxu0 0.0
    %188 = vmatprep.subr.mxu0 0.0
    %189 = vmatpush1.msra.mxu0 0.0
    %190 = vmatprep.subr.mxu0 0.0
    %191 = vmatpush1.msra.mxu0 0.0
    %192 = vmatprep.subr.mxu0 0.0
    %193 = vmatpush1.msra.mxu0 0.0
    %194 = vmatprep.subr.mxu0 0.0
    %195 = vmatpush1.msra.mxu0 0.0
    %196 = vmatprep.subr.mxu0 0.0
    %197 = vmatpush1.msra.mxu0 0.0
    %198 = vmatprep.subr.mxu0 0.0
    %199 = vmatpush1.msra.mxu0 0.0
    %200 = vmatprep.subr.mxu0 0.0
    %201 = vmatpush1.msra.mxu0 0.0
    %202 = vmatprep.subr.mxu0 0.0
    %203 = vmatpush1.msra.mxu0 0.0
    %204 = vmatprep.subr.mxu0 0.0
    %205 = vmatpush1.msra.mxu0 0.0
    %206 = vmatprep.mubr.f32.mxu0 0.0
    %207 = vmatmul.mubr.f32.gmra.mrb[0].mxu0 %v140
    %v208 = vpop.f32.mrb[0].mxu0
    %v209 = vadd.f32 0.0, %v208
    %v210 = vpop.f32.mrb[0].mxu0
    %211 = vdwg.mxu0
    %v212 = vld [vmem:[%s6] sm:$0x1]
    %v213 = vlaneseq
    %v214 = vshrl.u32 %v213, 7
    %v215 = vsub.s32 0, %v214
    %v216 = vrot.slane %v212, %v215
    %v217 = vsub.f32 %v209, %v216
    %v218 = vld [vmem:[%s6 + $0x1] sm:$0x1]
    %v219 = vlaneseq
    %v220 = vshrl.u32 %v219, 7
    %v221 = vsub.s32 0, %v220
    %v222 = vrot.slane %v218, %v221
    %v223 = vmul.f32 %v217, %v222
    %224 = vst [vmem:[#allocation2] sm:$0xff] %v223
    // Predicated region
    $region30: #{critic_forward.3} parent=1 // pred_check
      _
    $region31: #{critic_forward.3} parent=1 // pred_check_branch
      %226 = sbr.rel (0) target = $region33
    $region32: #{critic_forward.3} parent=1 // pred_region
      %s228 = ssub.s32 128, 128
      %229 = vsyncadd [#allocation3], %s228
      %s231 = sshll.u32 [#allocation2], 4
      %s232 = int_to_ptr.vmem [resolvable:$true] %s231
      %234 = dma.vmem_to_hbm [thread:$0]  %s232, 128, %s7, [#allocation3]
    $region33: #{critic_forward.3} parent=1 // pred_fallthru
      _
    // Predicated region
    $region34: #{critic_forward.3} parent=1 // pred_check
      _
    $region35: #{critic_forward.3} parent=1 // pred_check_branch
      %236 = sbr.rel (0) target = $region37
    $region36: #{critic_forward.3} parent=1 // pred_region
      %237 = dma.done [#allocation3], 128
    $region37: #{critic_forward.3} parent=1 // pred_fallthru
      _
    %238 = vsyncpa [#allocation3], 1

</llo_original>
